<compile_context>
chip_gen: v7x
topology: tpu7x:2x2x1
jax: 0.10.0
libtpu: 0.0.40
codegen_flags: <defaults>
</compile_context>

<pallas_src>
import functools

import jax
import jax.numpy as jnp
from jax.experimental import pallas as pl
from jax.experimental.pallas import tpu as pltpu

PAD = 128            # padded width of every layer (lane-aligned)
NUM_LAYERS = 9       # encoder(3) + decoder(3) + re_encoder(3)
TB_MAX = 512         # max batch tile
TB_ALIGN = 16        # bf16 sublane packing


def _cdiv(a, b):
    return -(-a // b)


def _round_up(n, m):
    return _cdiv(n, m) * m


def _generator_kernel(x_ref, w_ref, b_ref, out_ref):
    """x_ref:  [TB, 128]       bf16 (batch tile, zero-padded features)
       w_ref:  [9, 128, 128]   bf16 (stacked zero-padded weights, y = x @ W)
       b_ref:  [9, 1, 128]     f32  (stacked zero-padded biases)
       out_ref:[TB, 128]       f32  (z | x_rec | z_rec on disjoint lanes)
    """

    def linear(h_bf16, li):
        # bf16 MXU matmul, f32 accumulation; bias add stays f32 on the VPU.
        y = jnp.dot(h_bf16, w_ref[li], preferred_element_type=jnp.float32)
        return y + b_ref[li]

    def relu_bf16(h_f32):
        # ReLU in f32 (v5e-safe), then cast once for the next MXU matmul.
        return jnp.maximum(h_f32, 0.0).astype(jnp.bfloat16)

    x = x_ref[...]                       # bf16, read directly

    # z = encoder(x)     -> non-zero lanes [0 : latent)
    h = relu_bf16(linear(x, 0))
    h = relu_bf16(linear(h, 1))
    z = linear(h, 2)
    out_ref[...] = z                     # early store, ends z's live range soon

    # x_rec = decoder(z) -> non-zero lanes [latent : latent+input)
    h = relu_bf16(linear(z.astype(jnp.bfloat16), 3))
    h = relu_bf16(linear(h, 4))
    xr = linear(h, 5)
    out_ref[...] += xr                   # disjoint lanes: exact

    # z_rec = re_encoder(x_rec) -> non-zero lanes [latent+input : ...+latent)
    h = relu_bf16(linear(xr.astype(jnp.bfloat16), 6))
    h = relu_bf16(linear(h, 7))
    zr = linear(h, 8)
    out_ref[...] += zr                   # disjoint lanes: exact


def _choose_tile(B):
    """Minimize batch padding, keep TB a multiple of 16, cap at TB_MAX, and
    give mid/large batches >=2 grid steps so both v7x TensorCores are used."""
    n_tiles = max(1, _cdiv(B, TB_MAX))
    if n_tiles == 1 and B >= 2 * 128:
        n_tiles = 2
    tb = _round_up(_cdiv(B, n_tiles), TB_ALIGN)
    return tb


@functools.partial(jax.jit, static_argnames=("input_dim", "latent_dim"))
def generator_forward(x, w_stack, b_stack, *, input_dim, latent_dim):
    """x: [B, input_dim] f32. w_stack: [9,128,128] bf16. b_stack: [9,1,128] f32.
       Returns (z, x_reconstructed, z_reconstructed), matching Generator.forward."""
    B = x.shape[0]
    TB = _choose_tile(B)
    Bp = _round_up(B, TB)

    # Zero-pad batch rows / feature lanes; cast to bf16 here (fused with pad).
    xp = jnp.zeros((Bp, PAD), jnp.bfloat16).at[:B, :input_dim].set(
        x.astype(jnp.bfloat16))

    grid = (Bp // TB,)

    bytes_accessed = (Bp * PAD * 2            # bf16 input
                      + w_stack.size * 2      # bf16 weights (resident, once)
                      + b_stack.size * 4      # f32 biases (resident, once)
                      + Bp * PAD * 4)         # f32 lane-packed output
    flops = 2 * Bp * PAD * PAD * NUM_LAYERS

    out = pl.pallas_call(
        _generator_kernel,
        out_shape=jax.ShapeDtypeStruct((Bp, PAD), jnp.float32),
        grid_spec=pltpu.PrefetchScalarGridSpec(
            num_scalar_prefetch=0,
            grid=grid,
            in_specs=[
                pl.BlockSpec((TB, PAD), lambda i: (i, 0)),
                # Weights/biases: constant block index -> stay resident.
                pl.BlockSpec((NUM_LAYERS, PAD, PAD), lambda i: (0, 0, 0)),
                pl.BlockSpec((NUM_LAYERS, 1, PAD), lambda i: (0, 0, 0)),
            ],
            out_specs=pl.BlockSpec((TB, PAD), lambda i: (i, 0)),
        ),
        compiler_params=pltpu.CompilerParams(
            dimension_semantics=("parallel",)),
        cost_estimate=pl.CostEstimate(
            flops=flops, transcendentals=0, bytes_accessed=bytes_accessed),
    )(xp, w_stack, b_stack)

    z_off = 0
    xr_off = latent_dim
    zr_off = latent_dim + input_dim
    z = out[:B, z_off:z_off + latent_dim]
    xr = out[:B, xr_off:xr_off + input_dim]
    zr = out[:B, zr_off:zr_off + latent_dim]
    return z, xr, zr


def _layer_dims(input_dim, latent_dim):
    return [
        (input_dim, 128), (128, 64), (64, latent_dim),       # encoder
        (latent_dim, 64), (64, 128), (128, input_dim),       # decoder
        (input_dim, 128), (128, 64), (64, latent_dim),       # re_encoder
    ]


def make_params(key, input_dim, latent_dim, dtype=jnp.float32):
    """Deterministic synthetic params mirroring the PyTorch module.
       W stored as [in_features, out_features] (transpose of nn.Linear.weight),
       b as [1, out_features], so y = x @ W + b == nn.Linear(x)."""
    params = []
    for (din, dout) in _layer_dims(input_dim, latent_dim):
        key, kw, kb = jax.random.split(key, 3)
        bound = 1.0 / jnp.sqrt(din)
        w = jax.random.uniform(kw, (din, dout), dtype, -bound, bound)
        b = jax.random.uniform(kb, (1, dout), dtype, -bound, bound)
        params += [w, b]
    return params


def pack_params(params, input_dim, latent_dim):
    """Zero-pad every layer to [128, 128] and stack into single slabs.
       Lane-pack the three result layers: layer-2 output cols at [0:latent),
       layer-5 output cols (and layer-6 weight ROWS) at [latent:latent+input),
       layer-8 output cols at [latent+input:latent+input+latent)."""
    assert input_dim <= PAD and latent_dim <= PAD, (
        "this kernel assumes input_dim, latent_dim <= 128")
    assert 2 * latent_dim + input_dim <= PAD, (
        "lane-packed output needs 2*latent_dim + input_dim <= 128")
    z_off = 0
    xr_off = latent_dim
    zr_off = latent_dim + input_dim

    dims = _layer_dims(input_dim, latent_dim)
    # (row_offset, col_offset) per layer.
    offsets = [
        (0, 0), (0, 0), (0, z_off),          # encoder (z at z_off)
        (z_off, 0), (0, 0), (0, xr_off),     # decoder (xr at xr_off)
        (xr_off, 0), (0, 0), (0, zr_off),    # re_encoder rows match xr_off
    ]

    w_stack = jnp.zeros((NUM_LAYERS, PAD, PAD), jnp.float32)
    b_stack = jnp.zeros((NUM_LAYERS, 1, PAD), jnp.float32)
    for li, ((din, dout), (ro, co)) in enumerate(zip(dims, offsets)):
        w = params[2 * li]
        b = params[2 * li + 1]
        w_stack = w_stack.at[li, ro:ro + din, co:co + dout].set(w)
        b_stack = b_stack.at[li, 0, co:co + dout].set(b[0])
    return w_stack.astype(jnp.bfloat16), b_stack


def _reference_forward(x, params, bf16_matmul):
    """Plain-JAX reference. bf16_matmul=True mirrors the kernel's MXU dtype."""
    def lin(h, w, b):
        if bf16_matmul:
            y = jnp.dot(h.astype(jnp.bfloat16), w.astype(jnp.bfloat16),
                        preferred_element_type=jnp.float32)
        else:
            y = jnp.dot(h, w, preferred_element_type=jnp.float32)
        return y + b

    p = params
    h = jax.nn.relu(lin(x, p[0], p[1]))
    h = jax.nn.relu(lin(h, p[2], p[3]))
    z = lin(h, p[4], p[5])
    h = jax.nn.relu(lin(z, p[6], p[7]))
    h = jax.nn.relu(lin(h, p[8], p[9]))
    xr = lin(h, p[10], p[11])
    h = jax.nn.relu(lin(xr, p[12], p[13]))
    h = jax.nn.relu(lin(h, p[14], p[15]))
    zr = lin(h, p[16], p[17])
    return z, xr, zr


if __name__ == "__main__":
    B, input_dim, latent_dim = 8, 32, 16

    key = jax.random.PRNGKey(0)
    key, kx = jax.random.split(key)
    x = jax.random.normal(kx, (B, input_dim), jnp.float32)
    params = make_params(key, input_dim, latent_dim)
    w_stack, b_stack = pack_params(params, input_dim, latent_dim)

    z, x_rec, z_rec = generator_forward(
        x, w_stack, b_stack, input_dim=input_dim, latent_dim=latent_dim)
    jax.block_until_ready((z, x_rec, z_rec))

    assert z.shape == (B, latent_dim)
    assert x_rec.shape == (B, input_dim)
    assert z_rec.shape == (B, latent_dim)

    # Check against a reference that quantizes matmul inputs to bf16 like the
    # kernel (tight tolerance); this also validates the lane-packing of the
    # layer-5 output columns vs layer-6 weight rows (re-encoder path).
    z_b, xr_b, zr_b = _reference_forward(x, params, bf16_matmul=True)
    assert jnp.allclose(z, z_b, atol=2e-3, rtol=2e-3)
    assert jnp.allclose(x_rec, xr_b, atol=2e-3, rtol=2e-3)
    assert jnp.allclose(z_rec, zr_b, atol=2e-3, rtol=2e-3)

    # Check against the exact f32 PyTorch-semantics reference (loose: bf16 MXU).
    z_f, xr_f, zr_f = _reference_forward(x, params, bf16_matmul=False)
    assert jnp.allclose(z, z_f, atol=1e-1, rtol=1e-1)
    assert jnp.allclose(x_rec, xr_f, atol=1e-1, rtol=1e-1)
    assert jnp.allclose(z_rec, zr_f, atol=1e-1, rtol=1e-1)

    print("KERNEL_OK")
</pallas_src>

<mosaic_0001>
module attributes {stable_mosaic.version = 11 : i64} {
  func.func @_generator_kernel(%arg0: i32, %arg1: memref<16x128xbf16, #tpu.memory_space<vmem>>, %arg2: memref<9x128x128xbf16, #tpu.memory_space<vmem>>, %arg3: memref<9x1x128xf32, #tpu.memory_space<vmem>>, %arg4: memref<16x128xf32, #tpu.memory_space<vmem>>) attributes {dimension_semantics = [#tpu.dimension_semantics<parallel>], iteration_bounds = array<i64: 1>, scalar_prefetch = 0 : i64, scratch_operands = 0 : i64, tpu.core_type = #tpu.core_type<tc>, window_params = [{transform_indices = @transform_0, window_bounds = array<i64: 16, 128>}, {pipeline_mode = #tpu.pipeline_mode<synchronous>, transform_indices = @transform_1, window_bounds = array<i64: 9, 128, 128>}, {pipeline_mode = #tpu.pipeline_mode<synchronous>, transform_indices = @transform_2, window_bounds = array<i64: 9, 1, 128>}, {transform_indices = @transform_3, window_bounds = array<i64: 16, 128>}]} {
    %c0 = arith.constant 0 : index
    %c0_0 = arith.constant 0 : index
    %0 = vector.load %arg1[%c0, %c0_0] : memref<16x128xbf16, #tpu.memory_space<vmem>>, vector<16x128xbf16>
    %c0_1 = arith.constant 0 : index
    %c0_2 = arith.constant 0 : index
    %c0_3 = arith.constant 0 : index
    %1 = vector.load %arg2[%c0_1, %c0_2, %c0_3] : memref<9x128x128xbf16, #tpu.memory_space<vmem>>, vector<1x128x128xbf16>
    %2 = vector.shape_cast %1 : vector<1x128x128xbf16> to vector<128x128xbf16>
    %cst = arith.constant dense<0.000000e+00> : vector<16x128xf32>
    %3 = tpu.matmul %0, %2, %cst {dimension_numbers = #tpu.dot_dimension_numbers<[1], [0], [0], [1], [0, 0, 1, 1], [], []>} : vector<16x128xbf16>, vector<128x128xbf16>, vector<16x128xf32> -> vector<16x128xf32>
    %c0_4 = arith.constant 0 : index
    %c0_5 = arith.constant 0 : index
    %c0_6 = arith.constant 0 : index
    %4 = vector.load %arg3[%c0_4, %c0_5, %c0_6] : memref<9x1x128xf32, #tpu.memory_space<vmem>>, vector<1x1x128xf32>
    %5 = vector.shape_cast %4 : vector<1x1x128xf32> to vector<1x128xf32>
    %6 = vector.broadcast %5 : vector<1x128xf32> to vector<16x128xf32>
    %7 = arith.addf %3, %6 : vector<16x128xf32>
    %cst_7 = arith.constant 0.000000e+00 : f32
    %8 = vector.broadcast %cst_7 : f32 to vector<16x128xf32>
    %9 = arith.maximumf %7, %8 : vector<16x128xf32>
    %10 = arith.truncf %9 : vector<16x128xf32> to vector<16x128xbf16>
    %c1 = arith.constant 1 : index
    %c0_8 = arith.constant 0 : index
    %c0_9 = arith.constant 0 : index
    %11 = vector.load %arg2[%c1, %c0_8, %c0_9] : memref<9x128x128xbf16, #tpu.memory_space<vmem>>, vector<1x128x128xbf16>
    %12 = vector.shape_cast %11 : vector<1x128x128xbf16> to vector<128x128xbf16>
    %cst_10 = arith.constant dense<0.000000e+00> : vector<16x128xf32>
    %13 = tpu.matmul %10, %12, %cst_10 {dimension_numbers = #tpu.dot_dimension_numbers<[1], [0], [0], [1], [0, 0, 1, 1], [], []>} : vector<16x128xbf16>, vector<128x128xbf16>, vector<16x128xf32> -> vector<16x128xf32>
    %c1_11 = arith.constant 1 : index
    %c0_12 = arith.constant 0 : index
    %c0_13 = arith.constant 0 : index
    %14 = vector.load %arg3[%c1_11, %c0_12, %c0_13] : memref<9x1x128xf32, #tpu.memory_space<vmem>>, vector<1x1x128xf32>
    %15 = vector.shape_cast %14 : vector<1x1x128xf32> to vector<1x128xf32>
    %16 = vector.broadcast %15 : vector<1x128xf32> to vector<16x128xf32>
    %17 = arith.addf %13, %16 : vector<16x128xf32>
    %cst_14 = arith.constant 0.000000e+00 : f32
    %18 = vector.broadcast %cst_14 : f32 to vector<16x128xf32>
    %19 = arith.maximumf %17, %18 : vector<16x128xf32>
    %20 = arith.truncf %19 : vector<16x128xf32> to vector<16x128xbf16>
    %c2 = arith.constant 2 : index
    %c0_15 = arith.constant 0 : index
    %c0_16 = arith.constant 0 : index
    %21 = vector.load %arg2[%c2, %c0_15, %c0_16] : memref<9x128x128xbf16, #tpu.memory_space<vmem>>, vector<1x128x128xbf16>
    %22 = vector.shape_cast %21 : vector<1x128x128xbf16> to vector<128x128xbf16>
    %cst_17 = arith.constant dense<0.000000e+00> : vector<16x128xf32>
    %23 = tpu.matmul %20, %22, %cst_17 {dimension_numbers = #tpu.dot_dimension_numbers<[1], [0], [0], [1], [0, 0, 1, 1], [], []>} : vector<16x128xbf16>, vector<128x128xbf16>, vector<16x128xf32> -> vector<16x128xf32>
    %c2_18 = arith.constant 2 : index
    %c0_19 = arith.constant 0 : index
    %c0_20 = arith.constant 0 : index
    %24 = vector.load %arg3[%c2_18, %c0_19, %c0_20] : memref<9x1x128xf32, #tpu.memory_space<vmem>>, vector<1x1x128xf32>
    %25 = vector.shape_cast %24 : vector<1x1x128xf32> to vector<1x128xf32>
    %26 = vector.broadcast %25 : vector<1x128xf32> to vector<16x128xf32>
    %27 = arith.addf %23, %26 : vector<16x128xf32>
    %c0_21 = arith.constant 0 : index
    %c0_22 = arith.constant 0 : index
    %28 = vector.load %arg4[%c0_21, %c0_22] : memref<16x128xf32, #tpu.memory_space<vmem>>, vector<16x128xf32>
    tpu.vector_store %arg4[%c0_21, %c0_22], %27 {strides = array<i32>} : memref<16x128xf32, #tpu.memory_space<vmem>>, vector<16x128xf32>,
    %29 = arith.truncf %27 : vector<16x128xf32> to vector<16x128xbf16>
    %c3 = arith.constant 3 : index
    %c0_23 = arith.constant 0 : index
    %c0_24 = arith.constant 0 : index
    %30 = vector.load %arg2[%c3, %c0_23, %c0_24] : memref<9x128x128xbf16, #tpu.memory_space<vmem>>, vector<1x128x128xbf16>
    %31 = vector.shape_cast %30 : vector<1x128x128xbf16> to vector<128x128xbf16>
    %cst_25 = arith.constant dense<0.000000e+00> : vector<16x128xf32>
    %32 = tpu.matmul %29, %31, %cst_25 {dimension_numbers = #tpu.dot_dimension_numbers<[1], [0], [0], [1], [0, 0, 1, 1], [], []>} : vector<16x128xbf16>, vector<128x128xbf16>, vector<16x128xf32> -> vector<16x128xf32>
    %c3_26 = arith.constant 3 : index
    %c0_27 = arith.constant 0 : index
    %c0_28 = arith.constant 0 : index
    %33 = vector.load %arg3[%c3_26, %c0_27, %c0_28] : memref<9x1x128xf32, #tpu.memory_space<vmem>>, vector<1x1x128xf32>
    %34 = vector.shape_cast %33 : vector<1x1x128xf32> to vector<1x128xf32>
    %35 = vector.broadcast %34 : vector<1x128xf32> to vector<16x128xf32>
    %36 = arith.addf %32, %35 : vector<16x128xf32>
    %cst_29 = arith.constant 0.000000e+00 : f32
    %37 = vector.broadcast %cst_29 : f32 to vector<16x128xf32>
    %38 = arith.maximumf %36, %37 : vector<16x128xf32>
    %39 = arith.truncf %38 : vector<16x128xf32> to vector<16x128xbf16>
    %c4 = arith.constant 4 : index
    %c0_30 = arith.constant 0 : index
    %c0_31 = arith.constant 0 : index
    %40 = vector.load %arg2[%c4, %c0_30, %c0_31] : memref<9x128x128xbf16, #tpu.memory_space<vmem>>, vector<1x128x128xbf16>
    %41 = vector.shape_cast %40 : vector<1x128x128xbf16> to vector<128x128xbf16>
    %cst_32 = arith.constant dense<0.000000e+00> : vector<16x128xf32>
    %42 = tpu.matmul %39, %41, %cst_32 {dimension_numbers = #tpu.dot_dimension_numbers<[1], [0], [0], [1], [0, 0, 1, 1], [], []>} : vector<16x128xbf16>, vector<128x128xbf16>, vector<16x128xf32> -> vector<16x128xf32>
    %c4_33 = arith.constant 4 : index
    %c0_34 = arith.constant 0 : index
    %c0_35 = arith.constant 0 : index
    %43 = vector.load %arg3[%c4_33, %c0_34, %c0_35] : memref<9x1x128xf32, #tpu.memory_space<vmem>>, vector<1x1x128xf32>
    %44 = vector.shape_cast %43 : vector<1x1x128xf32> to vector<1x128xf32>
    %45 = vector.broadcast %44 : vector<1x128xf32> to vector<16x128xf32>
    %46 = arith.addf %42, %45 : vector<16x128xf32>
    %cst_36 = arith.constant 0.000000e+00 : f32
    %47 = vector.broadcast %cst_36 : f32 to vector<16x128xf32>
    %48 = arith.maximumf %46, %47 : vector<16x128xf32>
    %49 = arith.truncf %48 : vector<16x128xf32> to vector<16x128xbf16>
    %c5 = arith.constant 5 : index
    %c0_37 = arith.constant 0 : index
    %c0_38 = arith.constant 0 : index
    %50 = vector.load %arg2[%c5, %c0_37, %c0_38] : memref<9x128x128xbf16, #tpu.memory_space<vmem>>, vector<1x128x128xbf16>
    %51 = vector.shape_cast %50 : vector<1x128x128xbf16> to vector<128x128xbf16>
    %cst_39 = arith.constant dense<0.000000e+00> : vector<16x128xf32>
    %52 = tpu.matmul %49, %51, %cst_39 {dimension_numbers = #tpu.dot_dimension_numbers<[1], [0], [0], [1], [0, 0, 1, 1], [], []>} : vector<16x128xbf16>, vector<128x128xbf16>, vector<16x128xf32> -> vector<16x128xf32>
    %c5_40 = arith.constant 5 : index
    %c0_41 = arith.constant 0 : index
    %c0_42 = arith.constant 0 : index
    %53 = vector.load %arg3[%c5_40, %c0_41, %c0_42] : memref<9x1x128xf32, #tpu.memory_space<vmem>>, vector<1x1x128xf32>
    %54 = vector.shape_cast %53 : vector<1x1x128xf32> to vector<1x128xf32>
    %55 = vector.broadcast %54 : vector<1x128xf32> to vector<16x128xf32>
    %56 = arith.addf %52, %55 : vector<16x128xf32>
    %c0_43 = arith.constant 0 : index
    %c0_44 = arith.constant 0 : index
    %57 = vector.load %arg4[%c0_43, %c0_44] : memref<16x128xf32, #tpu.memory_space<vmem>>, vector<16x128xf32>
    %58 = arith.addf %57, %56 : vector<16x128xf32>
    %c0_45 = arith.constant 0 : index
    %c0_46 = arith.constant 0 : index
    %59 = vector.load %arg4[%c0_45, %c0_46] : memref<16x128xf32, #tpu.memory_space<vmem>>, vector<16x128xf32>
    tpu.vector_store %arg4[%c0_45, %c0_46], %58 {strides = array<i32>} : memref<16x128xf32, #tpu.memory_space<vmem>>, vector<16x128xf32>,
    %60 = arith.truncf %56 : vector<16x128xf32> to vector<16x128xbf16>
    %c6 = arith.constant 6 : index
    %c0_47 = arith.constant 0 : index
    %c0_48 = arith.constant 0 : index
    %61 = vector.load %arg2[%c6, %c0_47, %c0_48] : memref<9x128x128xbf16, #tpu.memory_space<vmem>>, vector<1x128x128xbf16>
    %62 = vector.shape_cast %61 : vector<1x128x128xbf16> to vector<128x128xbf16>
    %cst_49 = arith.constant dense<0.000000e+00> : vector<16x128xf32>
    %63 = tpu.matmul %60, %62, %cst_49 {dimension_numbers = #tpu.dot_dimension_numbers<[1], [0], [0], [1], [0, 0, 1, 1], [], []>} : vector<16x128xbf16>, vector<128x128xbf16>, vector<16x128xf32> -> vector<16x128xf32>
    %c6_50 = arith.constant 6 : index
    %c0_51 = arith.constant 0 : index
    %c0_52 = arith.constant 0 : index
    %64 = vector.load %arg3[%c6_50, %c0_51, %c0_52] : memref<9x1x128xf32, #tpu.memory_space<vmem>>, vector<1x1x128xf32>
    %65 = vector.shape_cast %64 : vector<1x1x128xf32> to vector<1x128xf32>
    %66 = vector.broadcast %65 : vector<1x128xf32> to vector<16x128xf32>
    %67 = arith.addf %63, %66 : vector<16x128xf32>
    %cst_53 = arith.constant 0.000000e+00 : f32
    %68 = vector.broadcast %cst_53 : f32 to vector<16x128xf32>
    %69 = arith.maximumf %67, %68 : vector<16x128xf32>
    %70 = arith.truncf %69 : vector<16x128xf32> to vector<16x128xbf16>
    %c7 = arith.constant 7 : index
    %c0_54 = arith.constant 0 : index
    %c0_55 = arith.constant 0 : index
    %71 = vector.load %arg2[%c7, %c0_54, %c0_55] : memref<9x128x128xbf16, #tpu.memory_space<vmem>>, vector<1x128x128xbf16>
    %72 = vector.shape_cast %71 : vector<1x128x128xbf16> to vector<128x128xbf16>
    %cst_56 = arith.constant dense<0.000000e+00> : vector<16x128xf32>
    %73 = tpu.matmul %70, %72, %cst_56 {dimension_numbers = #tpu.dot_dimension_numbers<[1], [0], [0], [1], [0, 0, 1, 1], [], []>} : vector<16x128xbf16>, vector<128x128xbf16>, vector<16x128xf32> -> vector<16x128xf32>
    %c7_57 = arith.constant 7 : index
    %c0_58 = arith.constant 0 : index
    %c0_59 = arith.constant 0 : index
    %74 = vector.load %arg3[%c7_57, %c0_58, %c0_59] : memref<9x1x128xf32, #tpu.memory_space<vmem>>, vector<1x1x128xf32>
    %75 = vector.shape_cast %74 : vector<1x1x128xf32> to vector<1x128xf32>
    %76 = vector.broadcast %75 : vector<1x128xf32> to vector<16x128xf32>
    %77 = arith.addf %73, %76 : vector<16x128xf32>
    %cst_60 = arith.constant 0.000000e+00 : f32
    %78 = vector.broadcast %cst_60 : f32 to vector<16x128xf32>
    %79 = arith.maximumf %77, %78 : vector<16x128xf32>
    %80 = arith.truncf %79 : vector<16x128xf32> to vector<16x128xbf16>
    %c8 = arith.constant 8 : index
    %c0_61 = arith.constant 0 : index
    %c0_62 = arith.constant 0 : index
    %81 = vector.load %arg2[%c8, %c0_61, %c0_62] : memref<9x128x128xbf16, #tpu.memory_space<vmem>>, vector<1x128x128xbf16>
    %82 = vector.shape_cast %81 : vector<1x128x128xbf16> to vector<128x128xbf16>
    %cst_63 = arith.constant dense<0.000000e+00> : vector<16x128xf32>
    %83 = tpu.matmul %80, %82, %cst_63 {dimension_numbers = #tpu.dot_dimension_numbers<[1], [0], [0], [1], [0, 0, 1, 1], [], []>} : vector<16x128xbf16>, vector<128x128xbf16>, vector<16x128xf32> -> vector<16x128xf32>
    %c8_64 = arith.constant 8 : index
    %c0_65 = arith.constant 0 : index
    %c0_66 = arith.constant 0 : index
    %84 = vector.load %arg3[%c8_64, %c0_65, %c0_66] : memref<9x1x128xf32, #tpu.memory_space<vmem>>, vector<1x1x128xf32>
    %85 = vector.shape_cast %84 : vector<1x1x128xf32> to vector<1x128xf32>
    %86 = vector.broadcast %85 : vector<1x128xf32> to vector<16x128xf32>
    %87 = arith.addf %83, %86 : vector<16x128xf32>
    %c0_67 = arith.constant 0 : index
    %c0_68 = arith.constant 0 : index
    %88 = vector.load %arg4[%c0_67, %c0_68] : memref<16x128xf32, #tpu.memory_space<vmem>>, vector<16x128xf32>
    %89 = arith.addf %88, %87 : vector<16x128xf32>
    %c0_69 = arith.constant 0 : index
    %c0_70 = arith.constant 0 : index
    %90 = vector.load %arg4[%c0_69, %c0_70] : memref<16x128xf32, #tpu.memory_space<vmem>>, vector<16x128xf32>
    tpu.vector_store %arg4[%c0_69, %c0_70], %89 {strides = array<i32>} : memref<16x128xf32, #tpu.memory_space<vmem>>, vector<16x128xf32>,
    return
  }
  func.func @transform_0(%arg0: i32) -> (i32, i32) {
    %c0_i32 = arith.constant 0 : i32
    %c0_i32_0 = arith.constant 0 : i32
    return %arg0, %c0_i32 : i32, i32
  }
  func.func @transform_1(%arg0: i32) -> (i32, i32, i32) {
    %c0_i32 = arith.constant 0 : i32
    %c0_i32_0 = arith.constant 0 : i32
    %c0_i32_1 = arith.constant 0 : i32
    %c0_i32_2 = arith.constant 0 : i32
    return %c0_i32, %c0_i32_0, %c0_i32_1 : i32, i32, i32
  }
  func.func @transform_2(%arg0: i32) -> (i32, i32, i32) {
    %c0_i32 = arith.constant 0 : i32
    %c0_i32_0 = arith.constant 0 : i32
    %c0_i32_1 = arith.constant 0 : i32
    %c0_i32_2 = arith.constant 0 : i32
    return %c0_i32, %c0_i32_0, %c0_i32_1 : i32, i32, i32
  }
  func.func @transform_3(%arg0: i32) -> (i32, i32) {
    %c0_i32 = arith.constant 0 : i32
    %c0_i32_0 = arith.constant 0 : i32
    return %arg0, %c0_i32 : i32, i32
  }
}

</mosaic_0001>

<llo_original>
// kernel: generator_forward.1
$region0: #{generator_forward.1}
  #allocation0 [shape = 'u32[]', space=smem, size = 0x4, offset = 0x4, fixed_abs, tag = 'smem constant byte address 0x4 - core index']
  #allocation1 [shape = 'u32[144,128]{1,0:T(1,128)}', space=vmem, size = 0x12000, scoped, tag = 'internal scratch']
  %s0 = inlined_call_operand.vmem [shape: bf16[16,128], index: 0, kind: input, shape index: {}]
  %s1 = inlined_call_operand.hbm [shape: bf16[9,128,128], index: 1, kind: input, shape index: {}]
  %s2 = inlined_call_operand.vmem [shape: f32[9,1,128], index: 2, kind: input, shape index: {}]
  %s3 = inlined_call_operand.vmem [shape: f32[16,128], index: 3, kind: output, shape index: {}]
  %s4 = sld [smem:[#allocation0]]
  $region26: #{generator_forward.1} parent=0
    _
  %s6 = ssub.s32 1, %s4
  %s7 = scalar_select 0, %s6, %s4
  $region1: #{generator_forward.1} parent=0
    #allocation2 [shape = 'u8[294912]{0}', space=vmem, size = 0x48000, scoped, tag = 'input window, operand 1, single buffered']
    #allocation3 [shape = 's32[1]{0}', space=sflag, size = 0x4, scoped, tag = 'scoped memory for generator_forward.1']
    %8 = vsyncpa [#allocation3], 0
    // Predicated region
    $region2: #{generator_forward.1} parent=1 // pred_check
      _
    $region3: #{generator_forward.1} parent=1 // pred_check_branch
      %10 = sbr.rel (0) target = $region5
    $region4: #{generator_forward.1} parent=1 // pred_region
      _
    $region5: #{generator_forward.1} parent=1 // pred_fallthru
      _
    // Predicated region
    $region6: #{generator_forward.1} parent=1 // pred_check
      _
    $region7: #{generator_forward.1} parent=1 // pred_check_branch
      %12 = sbr.rel (0) target = $region9
    $region8: #{generator_forward.1} parent=1 // pred_region
      %s14 = ssub.s32 9216, 9216
      %15 = vsyncadd [#allocation3], %s14
      %s16 = sshll.u32 [#allocation2], 4
      %s17 = int_to_ptr.vmem [resolvable:$true] %s16
      %22 = dma.hbm_to_vmem [thread:$0]  %s1, 9216, %s17, [#allocation3], 64, 64, 4
    $region9: #{generator_forward.1} parent=1 // pred_fallthru
      _
    // Predicated region
    $region10: #{generator_forward.1} parent=1 // pred_check
      _
    $region11: #{generator_forward.1} parent=1 // pred_check_branch
      %24 = sbr.rel (0) target = $region13
    $region12: #{generator_forward.1} parent=1 // pred_region
      _
    $region13: #{generator_forward.1} parent=1 // pred_fallthru
      _
    // Predicated region
    $region14: #{generator_forward.1} parent=1 // pred_check
      _
    $region15: #{generator_forward.1} parent=1 // pred_check_branch
      %26 = sbr.rel (0) target = $region17
    $region16: #{generator_forward.1} parent=1 // pred_region
      %27 = dma.done [#allocation3], 9216
    $region17: #{generator_forward.1} parent=1 // pred_fallthru
      _
    %v29 = vld [vmem:[%s0] sm:$0xf]
    %v30 = vld [vmem:[%s0 + $0x4] sm:$0xf]
    %v31 = vld [vmem:[#allocation2] sm:$0xf]
    %v32 = vld [vmem:[#allocation2 + $0x4] sm:$0xf]
    %v33 = vld [vmem:[#allocation2 + $0x8] sm:$0xf]
    %v34 = vld [vmem:[#allocation2 + $0xc] sm:$0xf]
    %v35 = vld [vmem:[#allocation2 + $0x10] sm:$0xf]
    %v36 = vld [vmem:[#allocation2 + $0x14] sm:$0xf]
    %v37 = vld [vmem:[#allocation2 + $0x18] sm:$0xf]
    %v38 = vld [vmem:[#allocation2 + $0x1c] sm:$0xf]
    %v39 = vld [vmem:[#allocation2 + $0x20] sm:$0xf]
    %v40 = vld [vmem:[#allocation2 + $0x24] sm:$0xf]
    %v41 = vld [vmem:[#allocation2 + $0x28] sm:$0xf]
    %v42 = vld [vmem:[#allocation2 + $0x2c] sm:$0xf]
    %v43 = vld [vmem:[#allocation2 + $0x30] sm:$0xf]
    %v44 = vld [vmem:[#allocation2 + $0x34] sm:$0xf]
    %v45 = vld [vmem:[#allocation2 + $0x38] sm:$0xf]
    %v46 = vld [vmem:[#allocation2 + $0x3c] sm:$0xf]
    %v47 = vld [vmem:[%s2] sm:$0x1]
    %v49 = vlaneseq
    %v50 = vshrl.u32 %v49, 7
    %v51 = vsub.s32 0, %v50
    %v52 = vrot.slane %v47, %v51
    %v56 = vunpack.c.l.b16 %v29
    %v57 = vunpack.c.l.b16 %v30
    %v58 = vpack.c.b16 %v57, %v56
    %v76 = vunpack.c.l.b16 %v31
    %v77 = vunpack.c.l.b16 %v32
    %v78 = vunpack.c.l.b16 %v33
    %v79 = vunpack.c.l.b16 %v34
    %v80 = vunpack.c.l.b16 %v35
    %v81 = vunpack.c.l.b16 %v36
    %v82 = vunpack.c.l.b16 %v37
    %v83 = vunpack.c.l.b16 %v38
    %v84 = vunpack.c.l.b16 %v39
    %v85 = vunpack.c.l.b16 %v40
    %v86 = vunpack.c.l.b16 %v41
    %v87 = vunpack.c.l.b16 %v42
    %v88 = vunpack.c.l.b16 %v43
    %v89 = vunpack.c.l.b16 %v44
    %v90 = vunpack.c.l.b16 %v45
    %v91 = vunpack.c.l.b16 %v46
    %v92 = vpack.c.b16 %v77, %v76
    %v93 = vpack.c.b16 %v79, %v78
    %v94 = vpack.c.b16 %v81, %v80
    %v95 = vpack.c.b16 %v83, %v82
    %v96 = vpack.c.b16 %v85, %v84
    %v97 = vpack.c.b16 %v87, %v86
    %v98 = vpack.c.b16 %v89, %v88
    %v99 = vpack.c.b16 %v91, %v90
    %108 = vmatprep.subr.bf16.mxu0 0
    %109 = vmatpush1.bf16.msra.mxu0 %v92
    %110 = vmatprep.subr.bf16.mxu0 0
    %111 = vmatpush1.bf16.msra.mxu0 %v93
    %112 = vmatprep.subr.bf16.mxu0 0
    %113 = vmatpush1.bf16.msra.mxu0 %v94
    %114 = vmatprep.subr.bf16.mxu0 0
    %115 = vmatpush1.bf16.msra.mxu0 %v95
    %116 = vmatprep.subr.bf16.mxu0 0
    %117 = vmatpush1.bf16.msra.mxu0 %v96
    %118 = vmatprep.subr.bf16.mxu0 0
    %119 = vmatpush1.bf16.msra.mxu0 %v97
    %120 = vmatprep.subr.bf16.mxu0 0
    %121 = vmatpush1.bf16.msra.mxu0 %v98
    %122 = vmatprep.subr.bf16.mxu0 0
    %123 = vmatpush1.bf16.msra.mxu0 %v99
    %124 = vmatprep.subr.bf16.mxu0 0
    %125 = vmatpush1.bf16.msra.mxu0 0
    %126 = vmatprep.subr.bf16.mxu0 0
    %127 = vmatpush1.bf16.msra.mxu0 0
    %128 = vmatprep.subr.bf16.mxu0 0
    %129 = vmatpush1.bf16.msra.mxu0 0
    %130 = vmatprep.subr.bf16.mxu0 0
    %131 = vmatpush1.bf16.msra.mxu0 0
    %132 = vmatprep.subr.bf16.mxu0 0
    %133 = vmatpush1.bf16.msra.mxu0 0
    %134 = vmatprep.subr.bf16.mxu0 0
    %135 = vmatpush1.bf16.msra.mxu0 0
    %136 = vmatprep.subr.bf16.mxu0 0
    %137 = vmatpush1.bf16.msra.mxu0 0
    %138 = vmatprep.subr.bf16.mxu0 0
    %139 = vmatpush1.bf16.msra.mxu0 0
    %140 = vmatprep.mubr.bf16.mxu0 0
    %141 = vmatmul.mubr.bf16.gmra.mrb[0].mxu0 %v58
    %v142 = vpop.f32.mrb[0].mxu0
    %v143 = vadd.f32 %v52, %v142
    %v144 = vpop.f32.mrb[0].mxu0
    %v145 = vpop.f32.mrb[0].mxu0
    %v146 = vadd.f32 %v52, %v145
    %v147 = vpop.f32.mrb[0].mxu0
    %148 = vdwg.mxu0
    %v149 = vmax.f32 %v143, 0.0
    %v150 = vmax.f32 %v146, 0.0
    %v151 = vpack.c.bf16 %v150, %v149
    %s152 = scalar_lea.vmem [#allocation2], 64
    %v153 = vld [vmem:[%s152] sm:$0xf]
    %v154 = vld [vmem:[%s152 + $0x4] sm:$0xf]
    %v155 = vld [vmem:[%s152 + $0x8] sm:$0xf]
    %v156 = vld [vmem:[%s152 + $0xc] sm:$0xf]
    %v157 = vld [vmem:[%s152 + $0x10] sm:$0xf]
    %v158 = vld [vmem:[%s152 + $0x14] sm:$0xf]
    %v159 = vld [vmem:[%s152 + $0x18] sm:$0xf]
    %v160 = vld [vmem:[%s152 + $0x1c] sm:$0xf]
    %v161 = vld [vmem:[%s152 + $0x20] sm:$0xf]
    %v162 = vld [vmem:[%s152 + $0x24] sm:$0xf]
    %v163 = vld [vmem:[%s152 + $0x28] sm:$0xf]
    %v164 = vld [vmem:[%s152 + $0x2c] sm:$0xf]
    %v165 = vld [vmem:[%s152 + $0x30] sm:$0xf]
    %v166 = vld [vmem:[%s152 + $0x34] sm:$0xf]
    %v167 = vld [vmem:[%s152 + $0x38] sm:$0xf]
    %v168 = vld [vmem:[%s152 + $0x3c] sm:$0xf]
    %s169 = scalar_lea.vmem %s2, 1
    %v170 = vld [vmem:[%s169] sm:$0x1]
    %v172 = vlaneseq
    %v173 = vshrl.u32 %v172, 7
    %v174 = vsub.s32 0, %v173
    %v175 = vrot.slane %v170, %v174
    %v193 = vunpack.c.l.b16 %v153
    %v194 = vunpack.c.l.b16 %v154
    %v195 = vunpack.c.l.b16 %v155
    %v196 = vunpack.c.l.b16 %v156
    %v197 = vunpack.c.l.b16 %v157
    %v198 = vunpack.c.l.b16 %v158
    %v199 = vunpack.c.l.b16 %v159
    %v200 = vunpack.c.l.b16 %v160
    %v201 = vunpack.c.l.b16 %v161
    %v202 = vunpack.c.l.b16 %v162
    %v203 = vunpack.c.l.b16 %v163
    %v204 = vunpack.c.l.b16 %v164
    %v205 = vunpack.c.l.b16 %v165
    %v206 = vunpack.c.l.b16 %v166
    %v207 = vunpack.c.l.b16 %v167
    %v208 = vunpack.c.l.b16 %v168
    %v209 = vpack.c.b16 %v194, %v193
    %v210 = vpack.c.b16 %v196, %v195
    %v211 = vpack.c.b16 %v198, %v197
    %v212 = vpack.c.b16 %v200, %v199
    %v213 = vpack.c.b16 %v202, %v201
    %v214 = vpack.c.b16 %v204, %v203
    %v215 = vpack.c.b16 %v206, %v205
    %v216 = vpack.c.b16 %v208, %v207
    %225 = vmatprep.subr.bf16.mxu0 0
    %226 = vmatpush1.bf16.msra.mxu0 %v209
    %227 = vmatprep.subr.bf16.mxu0 0
    %228 = vmatpush1.bf16.msra.mxu0 %v210
    %229 = vmatprep.subr.bf16.mxu0 0
    %230 = vmatpush1.bf16.msra.mxu0 %v211
    %231 = vmatprep.subr.bf16.mxu0 0
    %232 = vmatpush1.bf16.msra.mxu0 %v212
    %233 = vmatprep.subr.bf16.mxu0 0
    %234 = vmatpush1.bf16.msra.mxu0 %v213
    %235 = vmatprep.subr.bf16.mxu0 0
    %236 = vmatpush1.bf16.msra.mxu0 %v214
    %237 = vmatprep.subr.bf16.mxu0 0
    %238 = vmatpush1.bf16.msra.mxu0 %v215
    %239 = vmatprep.subr.bf16.mxu0 0
    %240 = vmatpush1.bf16.msra.mxu0 %v216
    %241 = vmatprep.subr.bf16.mxu0 0
    %242 = vmatpush1.bf16.msra.mxu0 0
    %243 = vmatprep.subr.bf16.mxu0 0
    %244 = vmatpush1.bf16.msra.mxu0 0
    %245 = vmatprep.subr.bf16.mxu0 0
    %246 = vmatpush1.bf16.msra.mxu0 0
    %247 = vmatprep.subr.bf16.mxu0 0
    %248 = vmatpush1.bf16.msra.mxu0 0
    %249 = vmatprep.subr.bf16.mxu0 0
    %250 = vmatpush1.bf16.msra.mxu0 0
    %251 = vmatprep.subr.bf16.mxu0 0
    %252 = vmatpush1.bf16.msra.mxu0 0
    %253 = vmatprep.subr.bf16.mxu0 0
    %254 = vmatpush1.bf16.msra.mxu0 0
    %255 = vmatprep.subr.bf16.mxu0 0
    %256 = vmatpush1.bf16.msra.mxu0 0
    %257 = vmatprep.mubr.bf16.mxu0 0
    %258 = vmatmul.mubr.bf16.gmra.mrb[0].mxu0 %v151
    %v259 = vpop.f32.mrb[0].mxu0
    %v260 = vadd.f32 %v175, %v259
    %v261 = vpop.f32.mrb[0].mxu0
    %v262 = vpop.f32.mrb[0].mxu0
    %v263 = vadd.f32 %v175, %v262
    %v264 = vpop.f32.mrb[0].mxu0
    %265 = vdwg.mxu0
    %v266 = vmax.f32 %v260, 0.0
    %v267 = vmax.f32 %v263, 0.0
    %v268 = vpack.c.bf16 %v267, %v266
    %s269 = scalar_lea.vmem [#allocation2], 128
    %v270 = vld [vmem:[%s269] sm:$0xf]
    %v271 = vld [vmem:[%s269 + $0x4] sm:$0xf]
    %v272 = vld [vmem:[%s269 + $0x8] sm:$0xf]
    %v273 = vld [vmem:[%s269 + $0xc] sm:$0xf]
    %v274 = vld [vmem:[%s269 + $0x10] sm:$0xf]
    %v275 = vld [vmem:[%s269 + $0x14] sm:$0xf]
    %v276 = vld [vmem:[%s269 + $0x18] sm:$0xf]
    %v277 = vld [vmem:[%s269 + $0x1c] sm:$0xf]
    %v278 = vld [vmem:[%s269 + $0x20] sm:$0xf]
    %v279 = vld [vmem:[%s269 + $0x24] sm:$0xf]
    %v280 = vld [vmem:[%s269 + $0x28] sm:$0xf]
    %v281 = vld [vmem:[%s269 + $0x2c] sm:$0xf]
    %v282 = vld [vmem:[%s269 + $0x30] sm:$0xf]
    %v283 = vld [vmem:[%s269 + $0x34] sm:$0xf]
    %v284 = vld [vmem:[%s269 + $0x38] sm:$0xf]
    %v285 = vld [vmem:[%s269 + $0x3c] sm:$0xf]
    %s286 = scalar_lea.vmem %s2, 2
    %v287 = vld [vmem:[%s286] sm:$0x1]
    %v289 = vlaneseq
    %v290 = vshrl.u32 %v289, 7
    %v291 = vsub.s32 0, %v290
    %v292 = vrot.slane %v287, %v291
    %v310 = vunpack.c.l.b16 %v270
    %v311 = vunpack.c.l.b16 %v271
    %v312 = vunpack.c.l.b16 %v272
    %v313 = vunpack.c.l.b16 %v273
    %v314 = vunpack.c.l.b16 %v274
    %v315 = vunpack.c.l.b16 %v275
    %v316 = vunpack.c.l.b16 %v276
    %v317 = vunpack.c.l.b16 %v277
    %v318 = vunpack.c.l.b16 %v278
    %v319 = vunpack.c.l.b16 %v279
    %v320 = vunpack.c.l.b16 %v280
    %v321 = vunpack.c.l.b16 %v281
    %v322 = vunpack.c.l.b16 %v282
    %v323 = vunpack.c.l.b16 %v283
    %v324 = vunpack.c.l.b16 %v284
    %v325 = vunpack.c.l.b16 %v285
    %v326 = vpack.c.b16 %v311, %v310
    %v327 = vpack.c.b16 %v313, %v312
    %v328 = vpack.c.b16 %v315, %v314
    %v329 = vpack.c.b16 %v317, %v316
    %v330 = vpack.c.b16 %v319, %v318
    %v331 = vpack.c.b16 %v321, %v320
    %v332 = vpack.c.b16 %v323, %v322
    %v333 = vpack.c.b16 %v325, %v324
    %342 = vmatprep.subr.bf16.mxu0 0
    %343 = vmatpush1.bf16.msra.mxu0 %v326
    %344 = vmatprep.subr.bf16.mxu0 0
    %345 = vmatpush1.bf16.msra.mxu0 %v327
    %346 = vmatprep.subr.bf16.mxu0 0
    %347 = vmatpush1.bf16.msra.mxu0 %v328
    %348 = vmatprep.subr.bf16.mxu0 0
    %349 = vmatpush1.bf16.msra.mxu0 %v329
    %350 = vmatprep.subr.bf16.mxu0 0
    %351 = vmatpush1.bf16.msra.mxu0 %v330
    %352 = vmatprep.subr.bf16.mxu0 0
    %353 = vmatpush1.bf16.msra.mxu0 %v331
    %354 = vmatprep.subr.bf16.mxu0 0
    %355 = vmatpush1.bf16.msra.mxu0 %v332
    %356 = vmatprep.subr.bf16.mxu0 0
    %357 = vmatpush1.bf16.msra.mxu0 %v333
    %358 = vmatprep.subr.bf16.mxu0 0
    %359 = vmatpush1.bf16.msra.mxu0 0
    %360 = vmatprep.subr.bf16.mxu0 0
    %361 = vmatpush1.bf16.msra.mxu0 0
    %362 = vmatprep.subr.bf16.mxu0 0
    %363 = vmatpush1.bf16.msra.mxu0 0
    %364 = vmatprep.subr.bf16.mxu0 0
    %365 = vmatpush1.bf16.msra.mxu0 0
    %366 = vmatprep.subr.bf16.mxu0 0
    %367 = vmatpush1.bf16.msra.mxu0 0
    %368 = vmatprep.subr.bf16.mxu0 0
    %369 = vmatpush1.bf16.msra.mxu0 0
    %370 = vmatprep.subr.bf16.mxu0 0
    %371 = vmatpush1.bf16.msra.mxu0 0
    %372 = vmatprep.subr.bf16.mxu0 0
    %373 = vmatpush1.bf16.msra.mxu0 0
    %374 = vmatprep.mubr.bf16.mxu0 0
    %375 = vmatmul.mubr.bf16.gmra.mrb[0].mxu0 %v268
    %v376 = vpop.f32.mrb[0].mxu0
    %v377 = vadd.f32 %v292, %v376
    %v378 = vpop.f32.mrb[0].mxu0
    %v379 = vpop.f32.mrb[0].mxu0
    %v380 = vadd.f32 %v292, %v379
    %v381 = vpop.f32.mrb[0].mxu0
    %382 = vdwg.mxu0
    %383 = vst [vmem:[%s3] sm:$0xff] %v377
    %384 = vst [vmem:[%s3 + $0x8] sm:$0xff] %v380
    %v385 = vpack.c.bf16 %v380, %v377
    %s386 = scalar_lea.vmem [#allocation2], 192
    %v387 = vld [vmem:[%s386] sm:$0xf]
    %v388 = vld [vmem:[%s386 + $0x4] sm:$0xf]
    %v389 = vld [vmem:[%s386 + $0x8] sm:$0xf]
    %v390 = vld [vmem:[%s386 + $0xc] sm:$0xf]
    %v391 = vld [vmem:[%s386 + $0x10] sm:$0xf]
    %v392 = vld [vmem:[%s386 + $0x14] sm:$0xf]
    %v393 = vld [vmem:[%s386 + $0x18] sm:$0xf]
    %v394 = vld [vmem:[%s386 + $0x1c] sm:$0xf]
    %v395 = vld [vmem:[%s386 + $0x20] sm:$0xf]
    %v396 = vld [vmem:[%s386 + $0x24] sm:$0xf]
    %v397 = vld [vmem:[%s386 + $0x28] sm:$0xf]
    %v398 = vld [vmem:[%s386 + $0x2c] sm:$0xf]
    %v399 = vld [vmem:[%s386 + $0x30] sm:$0xf]
    %v400 = vld [vmem:[%s386 + $0x34] sm:$0xf]
    %v401 = vld [vmem:[%s386 + $0x38] sm:$0xf]
    %v402 = vld [vmem:[%s386 + $0x3c] sm:$0xf]
    %s403 = scalar_lea.vmem %s2, 3
    %v404 = vld [vmem:[%s403] sm:$0x1]
    %v406 = vlaneseq
    %v407 = vshrl.u32 %v406, 7
    %v408 = vsub.s32 0, %v407
    %v409 = vrot.slane %v404, %v408
    %v427 = vunpack.c.l.b16 %v387
    %v428 = vunpack.c.l.b16 %v388
    %v429 = vunpack.c.l.b16 %v389
    %v430 = vunpack.c.l.b16 %v390
    %v431 = vunpack.c.l.b16 %v391
    %v432 = vunpack.c.l.b16 %v392
    %v433 = vunpack.c.l.b16 %v393
    %v434 = vunpack.c.l.b16 %v394
    %v435 = vunpack.c.l.b16 %v395
    %v436 = vunpack.c.l.b16 %v396
    %v437 = vunpack.c.l.b16 %v397
    %v438 = vunpack.c.l.b16 %v398
    %v439 = vunpack.c.l.b16 %v399
    %v440 = vunpack.c.l.b16 %v400
    %v441 = vunpack.c.l.b16 %v401
    %v442 = vunpack.c.l.b16 %v402
    %v443 = vpack.c.b16 %v428, %v427
    %v444 = vpack.c.b16 %v430, %v429
    %v445 = vpack.c.b16 %v432, %v431
    %v446 = vpack.c.b16 %v434, %v433
    %v447 = vpack.c.b16 %v436, %v435
    %v448 = vpack.c.b16 %v438, %v437
    %v449 = vpack.c.b16 %v440, %v439
    %v450 = vpack.c.b16 %v442, %v441
    %459 = vmatprep.subr.bf16.mxu0 0
    %460 = vmatpush1.bf16.msra.mxu0 %v443
    %461 = vmatprep.subr.bf16.mxu0 0
    %462 = vmatpush1.bf16.msra.mxu0 %v444
    %463 = vmatprep.subr.bf16.mxu0 0
    %464 = vmatpush1.bf16.msra.mxu0 %v445
    %465 = vmatprep.subr.bf16.mxu0 0
    %466 = vmatpush1.bf16.msra.mxu0 %v446
    %467 = vmatprep.subr.bf16.mxu0 0
    %468 = vmatpush1.bf16.msra.mxu0 %v447
    %469 = vmatprep.subr.bf16.mxu0 0
    %470 = vmatpush1.bf16.msra.mxu0 %v448
    %471 = vmatprep.subr.bf16.mxu0 0
    %472 = vmatpush1.bf16.msra.mxu0 %v449
    %473 = vmatprep.subr.bf16.mxu0 0
    %474 = vmatpush1.bf16.msra.mxu0 %v450
    %475 = vmatprep.subr.bf16.mxu0 0
    %476 = vmatpush1.bf16.msra.mxu0 0
    %477 = vmatprep.subr.bf16.mxu0 0
    %478 = vmatpush1.bf16.msra.mxu0 0
    %479 = vmatprep.subr.bf16.mxu0 0
    %480 = vmatpush1.bf16.msra.mxu0 0
    %481 = vmatprep.subr.bf16.mxu0 0
    %482 = vmatpush1.bf16.msra.mxu0 0
    %483 = vmatprep.subr.bf16.mxu0 0
    %484 = vmatpush1.bf16.msra.mxu0 0
    %485 = vmatprep.subr.bf16.mxu0 0
    %486 = vmatpush1.bf16.msra.mxu0 0
    %487 = vmatprep.subr.bf16.mxu0 0
    %488 = vmatpush1.bf16.msra.mxu0 0
    %489 = vmatprep.subr.bf16.mxu0 0
    %490 = vmatpush1.bf16.msra.mxu0 0
    %491 = vmatprep.mubr.bf16.mxu0 0
    %492 = vmatmul.mubr.bf16.gmra.mrb[0].mxu0 %v385
    %v493 = vpop.f32.mrb[0].mxu0
    %v494 = vadd.f32 %v409, %v493
    %v495 = vpop.f32.mrb[0].mxu0
    %v496 = vpop.f32.mrb[0].mxu0
    %v497 = vadd.f32 %v409, %v496
    %v498 = vpop.f32.mrb[0].mxu0
    %499 = vdwg.mxu0
    %v500 = vmax.f32 %v494, 0.0
    %v501 = vmax.f32 %v497, 0.0
    %v502 = vpack.c.bf16 %v501, %v500
    %s503 = scalar_lea.vmem [#allocation2], 256
    %v504 = vld [vmem:[%s503] sm:$0xf]
    %v505 = vld [vmem:[%s503 + $0x4] sm:$0xf]
    %v506 = vld [vmem:[%s503 + $0x8] sm:$0xf]
    %v507 = vld [vmem:[%s503 + $0xc] sm:$0xf]
    %v508 = vld [vmem:[%s503 + $0x10] sm:$0xf]
    %v509 = vld [vmem:[%s503 + $0x14] sm:$0xf]
    %v510 = vld [vmem:[%s503 + $0x18] sm:$0xf]
    %v511 = vld [vmem:[%s503 + $0x1c] sm:$0xf]
    %v512 = vld [vmem:[%s503 + $0x20] sm:$0xf]
    %v513 = vld [vmem:[%s503 + $0x24] sm:$0xf]
    %v514 = vld [vmem:[%s503 + $0x28] sm:$0xf]
    %v515 = vld [vmem:[%s503 + $0x2c] sm:$0xf]
    %v516 = vld [vmem:[%s503 + $0x30] sm:$0xf]
    %v517 = vld [vmem:[%s503 + $0x34] sm:$0xf]
    %v518 = vld [vmem:[%s503 + $0x38] sm:$0xf]
    %v519 = vld [vmem:[%s503 + $0x3c] sm:$0xf]
    %s520 = scalar_lea.vmem %s2, 4
    %v521 = vld [vmem:[%s520] sm:$0x1]
    %v523 = vlaneseq
    %v524 = vshrl.u32 %v523, 7
    %v525 = vsub.s32 0, %v524
    %v526 = vrot.slane %v521, %v525
    %v544 = vunpack.c.l.b16 %v504
    %v545 = vunpack.c.l.b16 %v505
    %v546 = vunpack.c.l.b16 %v506
    %v547 = vunpack.c.l.b16 %v507
    %v548 = vunpack.c.l.b16 %v508
    %v549 = vunpack.c.l.b16 %v509
    %v550 = vunpack.c.l.b16 %v510
    %v551 = vunpack.c.l.b16 %v511
    %v552 = vunpack.c.l.b16 %v512
    %v553 = vunpack.c.l.b16 %v513
    %v554 = vunpack.c.l.b16 %v514
    %v555 = vunpack.c.l.b16 %v515
    %v556 = vunpack.c.l.b16 %v516
    %v557 = vunpack.c.l.b16 %v517
    %v558 = vunpack.c.l.b16 %v518
    %v559 = vunpack.c.l.b16 %v519
    %v560 = vpack.c.b16 %v545, %v544
    %v561 = vpack.c.b16 %v547, %v546
    %v562 = vpack.c.b16 %v549, %v548
    %v563 = vpack.c.b16 %v551, %v550
    %v564 = vpack.c.b16 %v553, %v552
    %v565 = vpack.c.b16 %v555, %v554
    %v566 = vpack.c.b16 %v557, %v556
    %v567 = vpack.c.b16 %v559, %v558
    %576 = vmatprep.subr.bf16.mxu0 0
    %577 = vmatpush1.bf16.msra.mxu0 %v560
    %578 = vmatprep.subr.bf16.mxu0 0
    %579 = vmatpush1.bf16.msra.mxu0 %v561
    %580 = vmatprep.subr.bf16.mxu0 0
    %581 = vmatpush1.bf16.msra.mxu0 %v562
    %582 = vmatprep.subr.bf16.mxu0 0
    %583 = vmatpush1.bf16.msra.mxu0 %v563
    %584 = vmatprep.subr.bf16.mxu0 0
    %585 = vmatpush1.bf16.msra.mxu0 %v564
    %586 = vmatprep.subr.bf16.mxu0 0
    %587 = vmatpush1.bf16.msra.mxu0 %v565
    %588 = vmatprep.subr.bf16.mxu0 0
    %589 = vmatpush1.bf16.msra.mxu0 %v566
    %590 = vmatprep.subr.bf16.mxu0 0
    %591 = vmatpush1.bf16.msra.mxu0 %v567
    %592 = vmatprep.subr.bf16.mxu0 0
    %593 = vmatpush1.bf16.msra.mxu0 0
    %594 = vmatprep.subr.bf16.mxu0 0
    %595 = vmatpush1.bf16.msra.mxu0 0
    %596 = vmatprep.subr.bf16.mxu0 0
    %597 = vmatpush1.bf16.msra.mxu0 0
    %598 = vmatprep.subr.bf16.mxu0 0
    %599 = vmatpush1.bf16.msra.mxu0 0
    %600 = vmatprep.subr.bf16.mxu0 0
    %601 = vmatpush1.bf16.msra.mxu0 0
    %602 = vmatprep.subr.bf16.mxu0 0
    %603 = vmatpush1.bf16.msra.mxu0 0
    %604 = vmatprep.subr.bf16.mxu0 0
    %605 = vmatpush1.bf16.msra.mxu0 0
    %606 = vmatprep.subr.bf16.mxu0 0
    %607 = vmatpush1.bf16.msra.mxu0 0
    %608 = vmatprep.mubr.bf16.mxu0 0
    %609 = vmatmul.mubr.bf16.gmra.mrb[0].mxu0 %v502
    %v610 = vpop.f32.mrb[0].mxu0
    %v611 = vadd.f32 %v526, %v610
    %v612 = vpop.f32.mrb[0].mxu0
    %v613 = vpop.f32.mrb[0].mxu0
    %v614 = vadd.f32 %v526, %v613
    %v615 = vpop.f32.mrb[0].mxu0
    %616 = vdwg.mxu0
    %v617 = vmax.f32 %v611, 0.0
    %v618 = vmax.f32 %v614, 0.0
    %v619 = vpack.c.bf16 %v618, %v617
    %s620 = scalar_lea.vmem [#allocation2], 320
    %v621 = vld [vmem:[%s620] sm:$0xf]
    %v622 = vld [vmem:[%s620 + $0x4] sm:$0xf]
    %v623 = vld [vmem:[%s620 + $0x8] sm:$0xf]
    %v624 = vld [vmem:[%s620 + $0xc] sm:$0xf]
    %v625 = vld [vmem:[%s620 + $0x10] sm:$0xf]
    %v626 = vld [vmem:[%s620 + $0x14] sm:$0xf]
    %v627 = vld [vmem:[%s620 + $0x18] sm:$0xf]
    %v628 = vld [vmem:[%s620 + $0x1c] sm:$0xf]
    %v629 = vld [vmem:[%s620 + $0x20] sm:$0xf]
    %v630 = vld [vmem:[%s620 + $0x24] sm:$0xf]
    %v631 = vld [vmem:[%s620 + $0x28] sm:$0xf]
    %v632 = vld [vmem:[%s620 + $0x2c] sm:$0xf]
    %v633 = vld [vmem:[%s620 + $0x30] sm:$0xf]
    %v634 = vld [vmem:[%s620 + $0x34] sm:$0xf]
    %v635 = vld [vmem:[%s620 + $0x38] sm:$0xf]
    %v636 = vld [vmem:[%s620 + $0x3c] sm:$0xf]
    %s637 = scalar_lea.vmem %s2, 5
    %v638 = vld [vmem:[%s637] sm:$0x1]
    %v640 = vlaneseq
    %v641 = vshrl.u32 %v640, 7
    %v642 = vsub.s32 0, %v641
    %v643 = vrot.slane %v638, %v642
    %v661 = vunpack.c.l.b16 %v621
    %v662 = vunpack.c.l.b16 %v622
    %v663 = vunpack.c.l.b16 %v623
    %v664 = vunpack.c.l.b16 %v624
    %v665 = vunpack.c.l.b16 %v625
    %v666 = vunpack.c.l.b16 %v626
    %v667 = vunpack.c.l.b16 %v627
    %v668 = vunpack.c.l.b16 %v628
    %v669 = vunpack.c.l.b16 %v629
    %v670 = vunpack.c.l.b16 %v630
    %v671 = vunpack.c.l.b16 %v631
    %v672 = vunpack.c.l.b16 %v632
    %v673 = vunpack.c.l.b16 %v633
    %v674 = vunpack.c.l.b16 %v634
    %v675 = vunpack.c.l.b16 %v635
    %v676 = vunpack.c.l.b16 %v636
    %v677 = vpack.c.b16 %v662, %v661
    %v678 = vpack.c.b16 %v664, %v663
    %v679 = vpack.c.b16 %v666, %v665
    %v680 = vpack.c.b16 %v668, %v667
    %v681 = vpack.c.b16 %v670, %v669
    %v682 = vpack.c.b16 %v672, %v671
    %v683 = vpack.c.b16 %v674, %v673
    %v684 = vpack.c.b16 %v676, %v675
    %693 = vmatprep.subr.bf16.mxu0 0
    %694 = vmatpush1.bf16.msra.mxu0 %v677
    %695 = vmatprep.subr.bf16.mxu0 0
    %696 = vmatpush1.bf16.msra.mxu0 %v678
    %697 = vmatprep.subr.bf16.mxu0 0
    %698 = vmatpush1.bf16.msra.mxu0 %v679
    %699 = vmatprep.subr.bf16.mxu0 0
    %700 = vmatpush1.bf16.msra.mxu0 %v680
    %701 = vmatprep.subr.bf16.mxu0 0
    %702 = vmatpush1.bf16.msra.mxu0 %v681
    %703 = vmatprep.subr.bf16.mxu0 0
    %704 = vmatpush1.bf16.msra.mxu0 %v682
    %705 = vmatprep.subr.bf16.mxu0 0
    %706 = vmatpush1.bf16.msra.mxu0 %v683
    %707 = vmatprep.subr.bf16.mxu0 0
    %708 = vmatpush1.bf16.msra.mxu0 %v684
    %709 = vmatprep.subr.bf16.mxu0 0
    %710 = vmatpush1.bf16.msra.mxu0 0
    %711 = vmatprep.subr.bf16.mxu0 0
    %712 = vmatpush1.bf16.msra.mxu0 0
    %713 = vmatprep.subr.bf16.mxu0 0
    %714 = vmatpush1.bf16.msra.mxu0 0
    %715 = vmatprep.subr.bf16.mxu0 0
    %716 = vmatpush1.bf16.msra.mxu0 0
    %717 = vmatprep.subr.bf16.mxu0 0
    %718 = vmatpush1.bf16.msra.mxu0 0
    %719 = vmatprep.subr.bf16.mxu0 0
    %720 = vmatpush1.bf16.msra.mxu0 0
    %721 = vmatprep.subr.bf16.mxu0 0
    %722 = vmatpush1.bf16.msra.mxu0 0
    %723 = vmatprep.subr.bf16.mxu0 0
    %724 = vmatpush1.bf16.msra.mxu0 0
    %725 = vmatprep.mubr.bf16.mxu0 0
    %726 = vmatmul.mubr.bf16.gmra.mrb[0].mxu0 %v619
    %v727 = vpop.f32.mrb[0].mxu0
    %v728 = vadd.f32 %v643, %v727
    %v729 = vpop.f32.mrb[0].mxu0
    %v730 = vpop.f32.mrb[0].mxu0
    %v731 = vadd.f32 %v643, %v730
    %v732 = vpop.f32.mrb[0].mxu0
    %733 = vdwg.mxu0
    %v734 = vld [vmem:[%s3] sm:$0xff]
    %v735 = vld [vmem:[%s3 + $0x8] sm:$0xff]
    %v736 = vadd.f32 %v734, %v728
    %v737 = vadd.f32 %v735, %v731
    %738 = vst [vmem:[%s3] sm:$0xff] %v736
    %739 = vst [vmem:[%s3 + $0x8] sm:$0xff] %v737
    %v740 = vpack.c.bf16 %v731, %v728
    %s741 = scalar_lea.vmem [#allocation2], 384
    %v742 = vld [vmem:[%s741] sm:$0xf]
    %v743 = vld [vmem:[%s741 + $0x4] sm:$0xf]
    %v744 = vld [vmem:[%s741 + $0x8] sm:$0xf]
    %v745 = vld [vmem:[%s741 + $0xc] sm:$0xf]
    %v746 = vld [vmem:[%s741 + $0x10] sm:$0xf]
    %v747 = vld [vmem:[%s741 + $0x14] sm:$0xf]
    %v748 = vld [vmem:[%s741 + $0x18] sm:$0xf]
    %v749 = vld [vmem:[%s741 + $0x1c] sm:$0xf]
    %v750 = vld [vmem:[%s741 + $0x20] sm:$0xf]
    %v751 = vld [vmem:[%s741 + $0x24] sm:$0xf]
    %v752 = vld [vmem:[%s741 + $0x28] sm:$0xf]
    %v753 = vld [vmem:[%s741 + $0x2c] sm:$0xf]
    %v754 = vld [vmem:[%s741 + $0x30] sm:$0xf]
    %v755 = vld [vmem:[%s741 + $0x34] sm:$0xf]
    %v756 = vld [vmem:[%s741 + $0x38] sm:$0xf]
    %v757 = vld [vmem:[%s741 + $0x3c] sm:$0xf]
    %s758 = scalar_lea.vmem %s2, 6
    %v759 = vld [vmem:[%s758] sm:$0x1]
    %v761 = vlaneseq
    %v762 = vshrl.u32 %v761, 7
    %v763 = vsub.s32 0, %v762
    %v764 = vrot.slane %v759, %v763
    %v782 = vunpack.c.l.b16 %v742
    %v783 = vunpack.c.l.b16 %v743
    %v784 = vunpack.c.l.b16 %v744
    %v785 = vunpack.c.l.b16 %v745
    %v786 = vunpack.c.l.b16 %v746
    %v787 = vunpack.c.l.b16 %v747
    %v788 = vunpack.c.l.b16 %v748
    %v789 = vunpack.c.l.b16 %v749
    %v790 = vunpack.c.l.b16 %v750
    %v791 = vunpack.c.l.b16 %v751
    %v792 = vunpack.c.l.b16 %v752
    %v793 = vunpack.c.l.b16 %v753
    %v794 = vunpack.c.l.b16 %v754
    %v795 = vunpack.c.l.b16 %v755
    %v796 = vunpack.c.l.b16 %v756
    %v797 = vunpack.c.l.b16 %v757
    %v798 = vpack.c.b16 %v783, %v782
    %v799 = vpack.c.b16 %v785, %v784
    %v800 = vpack.c.b16 %v787, %v786
    %v801 = vpack.c.b16 %v789, %v788
    %v802 = vpack.c.b16 %v791, %v790
    %v803 = vpack.c.b16 %v793, %v792
    %v804 = vpack.c.b16 %v795, %v794
    %v805 = vpack.c.b16 %v797, %v796
    %814 = vmatprep.subr.bf16.mxu0 0
    %815 = vmatpush1.bf16.msra.mxu0 %v798
    %816 = vmatprep.subr.bf16.mxu0 0
    %817 = vmatpush1.bf16.msra.mxu0 %v799
    %818 = vmatprep.subr.bf16.mxu0 0
    %819 = vmatpush1.bf16.msra.mxu0 %v800
    %820 = vmatprep.subr.bf16.mxu0 0
    %821 = vmatpush1.bf16.msra.mxu0 %v801
    %822 = vmatprep.subr.bf16.mxu0 0
    %823 = vmatpush1.bf16.msra.mxu0 %v802
    %824 = vmatprep.subr.bf16.mxu0 0
    %825 = vmatpush1.bf16.msra.mxu0 %v803
    %826 = vmatprep.subr.bf16.mxu0 0
    %827 = vmatpush1.bf16.msra.mxu0 %v804
    %828 = vmatprep.subr.bf16.mxu0 0
    %829 = vmatpush1.bf16.msra.mxu0 %v805
    %830 = vmatprep.subr.bf16.mxu0 0
    %831 = vmatpush1.bf16.msra.mxu0 0
    %832 = vmatprep.subr.bf16.mxu0 0
    %833 = vmatpush1.bf16.msra.mxu0 0
    %834 = vmatprep.subr.bf16.mxu0 0
    %835 = vmatpush1.bf16.msra.mxu0 0
    %836 = vmatprep.subr.bf16.mxu0 0
    %837 = vmatpush1.bf16.msra.mxu0 0
    %838 = vmatprep.subr.bf16.mxu0 0
    %839 = vmatpush1.bf16.msra.mxu0 0
    %840 = vmatprep.subr.bf16.mxu0 0
    %841 = vmatpush1.bf16.msra.mxu0 0
    %842 = vmatprep.subr.bf16.mxu0 0
    %843 = vmatpush1.bf16.msra.mxu0 0
    %844 = vmatprep.subr.bf16.mxu0 0
    %845 = vmatpush1.bf16.msra.mxu0 0
    %846 = vmatprep.mubr.bf16.mxu0 0
    %847 = vmatmul.mubr.bf16.gmra.mrb[0].mxu0 %v740
    %v848 = vpop.f32.mrb[0].mxu0
    %v849 = vadd.f32 %v764, %v848
    %v850 = vpop.f32.mrb[0].mxu0
    %v851 = vpop.f32.mrb[0].mxu0
    %v852 = vadd.f32 %v764, %v851
    %v853 = vpop.f32.mrb[0].mxu0
    %854 = vdwg.mxu0
    %v855 = vmax.f32 %v849, 0.0
    %v856 = vmax.f32 %v852, 0.0
    %v857 = vpack.c.bf16 %v856, %v855
    %s858 = scalar_lea.vmem [#allocation2], 448
    %v859 = vld [vmem:[%s858] sm:$0xf]
    %v860 = vld [vmem:[%s858 + $0x4] sm:$0xf]
    %v861 = vld [vmem:[%s858 + $0x8] sm:$0xf]
    %v862 = vld [vmem:[%s858 + $0xc] sm:$0xf]
    %v863 = vld [vmem:[%s858 + $0x10] sm:$0xf]
    %v864 = vld [vmem:[%s858 + $0x14] sm:$0xf]
    %v865 = vld [vmem:[%s858 + $0x18] sm:$0xf]
    %v866 = vld [vmem:[%s858 + $0x1c] sm:$0xf]
    %v867 = vld [vmem:[%s858 + $0x20] sm:$0xf]
    %v868 = vld [vmem:[%s858 + $0x24] sm:$0xf]
    %v869 = vld [vmem:[%s858 + $0x28] sm:$0xf]
    %v870 = vld [vmem:[%s858 + $0x2c] sm:$0xf]
    %v871 = vld [vmem:[%s858 + $0x30] sm:$0xf]
    %v872 = vld [vmem:[%s858 + $0x34] sm:$0xf]
    %v873 = vld [vmem:[%s858 + $0x38] sm:$0xf]
    %v874 = vld [vmem:[%s858 + $0x3c] sm:$0xf]
    %s875 = scalar_lea.vmem %s2, 7
    %v876 = vld [vmem:[%s875] sm:$0x1]
    %v878 = vlaneseq
    %v879 = vshrl.u32 %v878, 7
    %v880 = vsub.s32 0, %v879
    %v881 = vrot.slane %v876, %v880
    %v899 = vunpack.c.l.b16 %v859
    %v900 = vunpack.c.l.b16 %v860
    %v901 = vunpack.c.l.b16 %v861
    %v902 = vunpack.c.l.b16 %v862
    %v903 = vunpack.c.l.b16 %v863
    %v904 = vunpack.c.l.b16 %v864
    %v905 = vunpack.c.l.b16 %v865
    %v906 = vunpack.c.l.b16 %v866
    %v907 = vunpack.c.l.b16 %v867
    %v908 = vunpack.c.l.b16 %v868
    %v909 = vunpack.c.l.b16 %v869
    %v910 = vunpack.c.l.b16 %v870
    %v911 = vunpack.c.l.b16 %v871
    %v912 = vunpack.c.l.b16 %v872
    %v913 = vunpack.c.l.b16 %v873
    %v914 = vunpack.c.l.b16 %v874
    %v915 = vpack.c.b16 %v900, %v899
    %v916 = vpack.c.b16 %v902, %v901
    %v917 = vpack.c.b16 %v904, %v903
    %v918 = vpack.c.b16 %v906, %v905
    %v919 = vpack.c.b16 %v908, %v907
    %v920 = vpack.c.b16 %v910, %v909
    %v921 = vpack.c.b16 %v912, %v911
    %v922 = vpack.c.b16 %v914, %v913
    %931 = vmatprep.subr.bf16.mxu0 0
    %932 = vmatpush1.bf16.msra.mxu0 %v915
    %933 = vmatprep.subr.bf16.mxu0 0
    %934 = vmatpush1.bf16.msra.mxu0 %v916
    %935 = vmatprep.subr.bf16.mxu0 0
    %936 = vmatpush1.bf16.msra.mxu0 %v917
    %937 = vmatprep.subr.bf16.mxu0 0
    %938 = vmatpush1.bf16.msra.mxu0 %v918
    %939 = vmatprep.subr.bf16.mxu0 0
    %940 = vmatpush1.bf16.msra.mxu0 %v919
    %941 = vmatprep.subr.bf16.mxu0 0
    %942 = vmatpush1.bf16.msra.mxu0 %v920
    %943 = vmatprep.subr.bf16.mxu0 0
    %944 = vmatpush1.bf16.msra.mxu0 %v921
    %945 = vmatprep.subr.bf16.mxu0 0
    %946 = vmatpush1.bf16.msra.mxu0 %v922
    %947 = vmatprep.subr.bf16.mxu0 0
    %948 = vmatpush1.bf16.msra.mxu0 0
    %949 = vmatprep.subr.bf16.mxu0 0
    %950 = vmatpush1.bf16.msra.mxu0 0
    %951 = vmatprep.subr.bf16.mxu0 0
    %952 = vmatpush1.bf16.msra.mxu0 0
    %953 = vmatprep.subr.bf16.mxu0 0
    %954 = vmatpush1.bf16.msra.mxu0 0
    %955 = vmatprep.subr.bf16.mxu0 0
    %956 = vmatpush1.bf16.msra.mxu0 0
    %957 = vmatprep.subr.bf16.mxu0 0
    %958 = vmatpush1.bf16.msra.mxu0 0
    %959 = vmatprep.subr.bf16.mxu0 0
    %960 = vmatpush1.bf16.msra.mxu0 0
    %961 = vmatprep.subr.bf16.mxu0 0
    %962 = vmatpush1.bf16.msra.mxu0 0
    %963 = vmatprep.mubr.bf16.mxu0 0
    %964 = vmatmul.mubr.bf16.gmra.mrb[0].mxu0 %v857
    %v965 = vpop.f32.mrb[0].mxu0
    %v966 = vadd.f32 %v881, %v965
    %v967 = vpop.f32.mrb[0].mxu0
    %v968 = vpop.f32.mrb[0].mxu0
    %v969 = vadd.f32 %v881, %v968
    %v970 = vpop.f32.mrb[0].mxu0
    %971 = vdwg.mxu0
    %v972 = vmax.f32 %v966, 0.0
    %v973 = vmax.f32 %v969, 0.0
    %v974 = vpack.c.bf16 %v973, %v972
    %s975 = scalar_lea.vmem [#allocation2], 512
    %v976 = vld [vmem:[%s975] sm:$0xf]
    %v977 = vld [vmem:[%s975 + $0x4] sm:$0xf]
    %v978 = vld [vmem:[%s975 + $0x8] sm:$0xf]
    %v979 = vld [vmem:[%s975 + $0xc] sm:$0xf]
    %v980 = vld [vmem:[%s975 + $0x10] sm:$0xf]
    %v981 = vld [vmem:[%s975 + $0x14] sm:$0xf]
    %v982 = vld [vmem:[%s975 + $0x18] sm:$0xf]
    %v983 = vld [vmem:[%s975 + $0x1c] sm:$0xf]
    %v984 = vld [vmem:[%s975 + $0x20] sm:$0xf]
    %v985 = vld [vmem:[%s975 + $0x24] sm:$0xf]
    %v986 = vld [vmem:[%s975 + $0x28] sm:$0xf]
    %v987 = vld [vmem:[%s975 + $0x2c] sm:$0xf]
    %v988 = vld [vmem:[%s975 + $0x30] sm:$0xf]
    %v989 = vld [vmem:[%s975 + $0x34] sm:$0xf]
    %v990 = vld [vmem:[%s975 + $0x38] sm:$0xf]
    %v991 = vld [vmem:[%s975 + $0x3c] sm:$0xf]
    %s992 = scalar_lea.vmem %s2, 8
    %v993 = vld [vmem:[%s992] sm:$0x1]
    %v995 = vlaneseq
    %v996 = vshrl.u32 %v995, 7
    %v997 = vsub.s32 0, %v996
    %v998 = vrot.slane %v993, %v997
    %v1016 = vunpack.c.l.b16 %v976
    %v1017 = vunpack.c.l.b16 %v977
    %v1018 = vunpack.c.l.b16 %v978
    %v1019 = vunpack.c.l.b16 %v979
    %v1020 = vunpack.c.l.b16 %v980
    %v1021 = vunpack.c.l.b16 %v981
    %v1022 = vunpack.c.l.b16 %v982
    %v1023 = vunpack.c.l.b16 %v983
    %v1024 = vunpack.c.l.b16 %v984
    %v1025 = vunpack.c.l.b16 %v985
    %v1026 = vunpack.c.l.b16 %v986
    %v1027 = vunpack.c.l.b16 %v987
    %v1028 = vunpack.c.l.b16 %v988
    %v1029 = vunpack.c.l.b16 %v989
    %v1030 = vunpack.c.l.b16 %v990
    %v1031 = vunpack.c.l.b16 %v991
    %v1032 = vpack.c.b16 %v1017, %v1016
    %v1033 = vpack.c.b16 %v1019, %v1018
    %v1034 = vpack.c.b16 %v1021, %v1020
    %v1035 = vpack.c.b16 %v1023, %v1022
    %v1036 = vpack.c.b16 %v1025, %v1024
    %v1037 = vpack.c.b16 %v1027, %v1026
    %v1038 = vpack.c.b16 %v1029, %v1028
    %v1039 = vpack.c.b16 %v1031, %v1030
    %1048 = vmatprep.subr.bf16.mxu0 0
    %1049 = vmatpush1.bf16.msra.mxu0 %v1032
    %1050 = vmatprep.subr.bf16.mxu0 0
    %1051 = vmatpush1.bf16.msra.mxu0 %v1033
    %1052 = vmatprep.subr.bf16.mxu0 0
    %1053 = vmatpush1.bf16.msra.mxu0 %v1034
    %1054 = vmatprep.subr.bf16.mxu0 0
    %1055 = vmatpush1.bf16.msra.mxu0 %v1035
    %1056 = vmatprep.subr.bf16.mxu0 0
    %1057 = vmatpush1.bf16.msra.mxu0 %v1036
    %1058 = vmatprep.subr.bf16.mxu0 0
    %1059 = vmatpush1.bf16.msra.mxu0 %v1037
    %1060 = vmatprep.subr.bf16.mxu0 0
    %1061 = vmatpush1.bf16.msra.mxu0 %v1038
    %1062 = vmatprep.subr.bf16.mxu0 0
    %1063 = vmatpush1.bf16.msra.mxu0 %v1039
    %1064 = vmatprep.subr.bf16.mxu0 0
    %1065 = vmatpush1.bf16.msra.mxu0 0
    %1066 = vmatprep.subr.bf16.mxu0 0
    %1067 = vmatpush1.bf16.msra.mxu0 0
    %1068 = vmatprep.subr.bf16.mxu0 0
    %1069 = vmatpush1.bf16.msra.mxu0 0
    %1070 = vmatprep.subr.bf16.mxu0 0
    %1071 = vmatpush1.bf16.msra.mxu0 0
    %1072 = vmatprep.subr.bf16.mxu0 0
    %1073 = vmatpush1.bf16.msra.mxu0 0
    %1074 = vmatprep.subr.bf16.mxu0 0
    %1075 = vmatpush1.bf16.msra.mxu0 0
    %1076 = vmatprep.subr.bf16.mxu0 0
    %1077 = vmatpush1.bf16.msra.mxu0 0
    %1078 = vmatprep.subr.bf16.mxu0 0
    %1079 = vmatpush1.bf16.msra.mxu0 0
    %1080 = vmatprep.mubr.bf16.mxu0 0
    %1081 = vmatmul.mubr.bf16.gmra.mrb[0].mxu0 %v974
    %v1082 = vpop.f32.mrb[0].mxu0
    %v1083 = vadd.f32 %v998, %v1082
    %v1084 = vpop.f32.mrb[0].mxu0
    %v1085 = vpop.f32.mrb[0].mxu0
    %v1086 = vadd.f32 %v998, %v1085
    %v1087 = vpop.f32.mrb[0].mxu0
    %1088 = vdwg.mxu0
    %v1089 = vld [vmem:[%s3] sm:$0xff]
    %v1090 = vld [vmem:[%s3 + $0x8] sm:$0xff]
    %v1091 = vadd.f32 %v1089, %v1083
    %v1092 = vadd.f32 %v1090, %v1086
    %1093 = vst [vmem:[%s3] sm:$0xff] %v1091
    %1094 = vst [vmem:[%s3 + $0x8] sm:$0xff] %v1092
    // Predicated region
    $region18: #{generator_forward.1} parent=1 // pred_check
      _
    $region19: #{generator_forward.1} parent=1 // pred_check_branch
      %1096 = sbr.rel (0) target = $region21
    $region20: #{generator_forward.1} parent=1 // pred_region
      _
    $region21: #{generator_forward.1} parent=1 // pred_fallthru
      _
    // Predicated region
    $region22: #{generator_forward.1} parent=1 // pred_check
      _
    $region23: #{generator_forward.1} parent=1 // pred_check_branch
      %1098 = sbr.rel (0) target = $region25
    $region24: #{generator_forward.1} parent=1 // pred_region
      _
    $region25: #{generator_forward.1} parent=1 // pred_fallthru
      _
    %1099 = vsyncpa [#allocation3], 1

</llo_original>
